<compile_context>
chip_gen: v7x
topology: tpu7x:2x2x1
jax: 0.10.0
libtpu: 0.0.40
codegen_flags: <defaults>
</compile_context>

<pallas_src>
import functools

import jax
import jax.numpy as jnp
from jax.experimental import pallas as pl
from jax.experimental.pallas import tpu as pltpu


def _round_up(n, m):
    return ((n + m - 1) // m) * m


def _choose_tb(B, block_b, row_mult):
    """Rows per grid step: multiple of `row_mult`, <= block_b, minimal batch padding,
    and >=2 grid steps when the batch allows it (2-TC split on v7x)."""
    block_b = max(row_mult, _round_up(block_b, row_mult))
    n_steps = max(-(-B // block_b), 2 if B >= 2 * row_mult else 1)
    tb = _round_up(-(-B // n_steps), row_mult)
    return min(tb, block_b)


def preprocess_kernel(x_ref, w1_ref, b1_ref, w2_ref, b2_ref, o_ref):
    # fc1 + bias + relu: MXU matmul in the weight dtype, f32 accumulate, f32 bias add.
    x = x_ref[...].astype(w1_ref.dtype)
    t = jnp.dot(x, w1_ref[...], preferred_element_type=jnp.float32)
    t = jnp.maximum(t + b1_ref[...], 0.0)
    # fc2 + bias + relu.  NOTE: with bf16 weights the intermediate t is rounded to
    # bf16 between the two matmuls (standard mixed precision); use
    # pack_params(..., compute_dtype=jnp.float32) for end-to-end f32 semantics.
    u = jnp.dot(t.astype(w2_ref.dtype), w2_ref[...],
                preferred_element_type=jnp.float32)
    u = jnp.maximum(u + b2_ref[...], 0.0)
    o_ref[...] = u.astype(o_ref.dtype)


def pack_params(w1, b1, w2, b2, *, compute_dtype=jnp.bfloat16):
    """One-time parameter packing -- hoist out of the per-call path and cache.

    w1 : [input_size, H]   (pre-transposed PyTorch fc1.weight)
    b1 : [H] or [1, H]
    w2 : [H, H]            (pre-transposed PyTorch fc2.weight)
    b2 : [H] or [1, H]
    """
    w1 = jnp.asarray(w1, compute_dtype)
    w2 = jnp.asarray(w2, compute_dtype)
    b1 = jnp.reshape(jnp.asarray(b1, jnp.float32), (1, -1))
    b2 = jnp.reshape(jnp.asarray(b2, jnp.float32), (1, -1))
    return w1, b1, w2, b2


@functools.partial(jax.jit, static_argnames=("block_b",))
def preprocess(x, w1, b1, w2, b2, *, block_b=1024):
    """Equivalent of PyTorch PreProcess.forward: relu(fc2(relu(fc1(x)))).

    x              : [B, input_size]
    w1, b1, w2, b2 : from pack_params()
    Returns [B, H] in x.dtype.
    """
    B, K = x.shape
    H = w1.shape[1]
    out_dtype = x.dtype

    # Sublane quantum for the streamed x dtype (8 for f32, 16 for bf16, 32 for 8-bit).
    row_mult = max(8, 32 // jnp.dtype(x.dtype).itemsize)
    TB = _choose_tb(B, block_b, row_mult)
    Bp = _round_up(B, TB)
    if Bp != B:
        # Row-only pad (TB is chosen to keep the waste small); the feature (lane)
        # dimension is never padded, so x streams exactly its true bytes per row.
        x = jnp.pad(x, ((0, Bp - B), (0, 0)))

    grid = (Bp // TB,)
    out = pl.pallas_call(
        preprocess_kernel,
        out_shape=jax.ShapeDtypeStruct((Bp, H), out_dtype),
        grid_spec=pl.GridSpec(
            grid=grid,
            in_specs=[
                pl.BlockSpec((TB, K), lambda i: (i, 0)),   # streamed activation rows
                pl.BlockSpec((K, H), lambda i: (0, 0)),    # resident fc1 weight
                pl.BlockSpec((1, H), lambda i: (0, 0)),    # resident fc1 bias (f32)
                pl.BlockSpec((H, H), lambda i: (0, 0)),    # resident fc2 weight
                pl.BlockSpec((1, H), lambda i: (0, 0)),    # resident fc2 bias (f32)
            ],
            out_specs=pl.BlockSpec((TB, H), lambda i: (i, 0)),
        ),
        compiler_params=pltpu.CompilerParams(
            dimension_semantics=("parallel",)),
    )(x, w1, b1, w2, b2)

    return out if Bp == B else out[:B]


def make_params(key, input_size, processed_x_size, dtype=jnp.float32):
    """Deterministic synthetic parameters (PyTorch Linear init, pre-transposed)."""
    k1, k2, k3, k4 = jax.random.split(key, 4)
    s1 = 1.0 / jnp.sqrt(input_size)
    s2 = 1.0 / jnp.sqrt(processed_x_size)
    w1 = jax.random.uniform(k1, (input_size, processed_x_size), dtype, -s1, s1)
    b1 = jax.random.uniform(k2, (1, processed_x_size), dtype, -s1, s1)
    w2 = jax.random.uniform(k3, (processed_x_size, processed_x_size), dtype, -s2, s2)
    b2 = jax.random.uniform(k4, (1, processed_x_size), dtype, -s2, s2)
    return w1, b1, w2, b2


def _ref(x, w1, b1, w2, b2):
    t = jnp.maximum(x @ w1 + b1.reshape(1, -1), 0.0)
    return jnp.maximum(t @ w2 + b2.reshape(1, -1), 0.0)


if __name__ == "__main__":
    input_size = 32
    processed_x_size = 32

    key = jax.random.PRNGKey(0)
    kx, kp, kx2 = jax.random.split(key, 3)
    w1, b1, w2, b2 = make_params(kp, input_size, processed_x_size)

    # --- f32 operand path (bit-tight vs reference), tiny batch ------------------
    p32 = pack_params(w1, b1, w2, b2, compute_dtype=jnp.float32)
    batch = 8
    x = jax.random.normal(kx, (batch, input_size), jnp.float32)
    out = preprocess(x, *p32)
    jax.block_until_ready(out)
    ref = _ref(x, w1, b1, w2, b2)
    assert out.shape == (batch, processed_x_size)
    assert jnp.allclose(out, ref, atol=1e-5, rtol=1e-5)

    # --- default bf16 operands, larger batch (multi-step parallel grid, row pad) -
    pbf = pack_params(w1, b1, w2, b2)   # bf16 operands, f32 accumulate
    batch2 = 300
    x2 = jax.random.normal(kx2, (batch2, input_size), jnp.float32)
    out2 = preprocess(x2, *pbf)
    jax.block_until_ready(out2)
    ref2 = _ref(x2, w1, b1, w2, b2)
    assert out2.shape == (batch2, processed_x_size)
    assert jnp.allclose(out2, ref2, atol=1e-1, rtol=1e-1)

    print("KERNEL_OK")
</pallas_src>

<mosaic_0001>
module attributes {stable_mosaic.version = 11 : i64} {
  func.func @preprocess_kernel(%arg0: i32, %arg1: memref<8x32xf32, #tpu.memory_space<vmem>>, %arg2: memref<32x32xf32, #tpu.memory_space<vmem>>, %arg3: memref<1x32xf32, #tpu.memory_space<vmem>>, %arg4: memref<32x32xf32, #tpu.memory_space<vmem>>, %arg5: memref<1x32xf32, #tpu.memory_space<vmem>>, %arg6: memref<8x32xf32, #tpu.memory_space<vmem>>) attributes {dimension_semantics = [#tpu.dimension_semantics<parallel>], iteration_bounds = array<i64: 1>, scalar_prefetch = 0 : i64, scratch_operands = 0 : i64, tpu.core_type = #tpu.core_type<tc>, window_params = [{transform_indices = @transform_0, window_bounds = array<i64: 8, 32>}, {pipeline_mode = #tpu.pipeline_mode<synchronous>, transform_indices = @transform_1, window_bounds = array<i64: 32, 32>}, {pipeline_mode = #tpu.pipeline_mode<synchronous>, transform_indices = @transform_2, window_bounds = array<i64: 1, 32>}, {pipeline_mode = #tpu.pipeline_mode<synchronous>, transform_indices = @transform_3, window_bounds = array<i64: 32, 32>}, {pipeline_mode = #tpu.pipeline_mode<synchronous>, transform_indices = @transform_4, window_bounds = array<i64: 1, 32>}, {transform_indices = @transform_5, window_bounds = array<i64: 8, 32>}]} {
    %c0 = arith.constant 0 : index
    %c0_0 = arith.constant 0 : index
    %0 = vector.load %arg1[%c0, %c0_0] : memref<8x32xf32, #tpu.memory_space<vmem>>, vector<8x32xf32>
    %c0_1 = arith.constant 0 : index
    %c0_2 = arith.constant 0 : index
    %1 = vector.load %arg2[%c0_1, %c0_2] : memref<32x32xf32, #tpu.memory_space<vmem>>, vector<32x32xf32>
    %cst = arith.constant dense<0.000000e+00> : vector<8x32xf32>
    %2 = tpu.matmul %0, %1, %cst {dimension_numbers = #tpu.dot_dimension_numbers<[1], [0], [0], [1], [0, 0, 1, 1], [], []>} : vector<8x32xf32>, vector<32x32xf32>, vector<8x32xf32> -> vector<8x32xf32>
    %c0_3 = arith.constant 0 : index
    %c0_4 = arith.constant 0 : index
    %3 = vector.load %arg3[%c0_3, %c0_4] : memref<1x32xf32, #tpu.memory_space<vmem>>, vector<1x32xf32>
    %4 = vector.broadcast %3 : vector<1x32xf32> to vector<8x32xf32>
    %5 = arith.addf %2, %4 : vector<8x32xf32>
    %cst_5 = arith.constant 0.000000e+00 : f32
    %6 = vector.broadcast %cst_5 : f32 to vector<8x32xf32>
    %7 = arith.maximumf %5, %6 : vector<8x32xf32>
    %c0_6 = arith.constant 0 : index
    %c0_7 = arith.constant 0 : index
    %8 = vector.load %arg4[%c0_6, %c0_7] : memref<32x32xf32, #tpu.memory_space<vmem>>, vector<32x32xf32>
    %cst_8 = arith.constant dense<0.000000e+00> : vector<8x32xf32>
    %9 = tpu.matmul %7, %8, %cst_8 {dimension_numbers = #tpu.dot_dimension_numbers<[1], [0], [0], [1], [0, 0, 1, 1], [], []>} : vector<8x32xf32>, vector<32x32xf32>, vector<8x32xf32> -> vector<8x32xf32>
    %c0_9 = arith.constant 0 : index
    %c0_10 = arith.constant 0 : index
    %10 = vector.load %arg5[%c0_9, %c0_10] : memref<1x32xf32, #tpu.memory_space<vmem>>, vector<1x32xf32>
    %11 = vector.broadcast %10 : vector<1x32xf32> to vector<8x32xf32>
    %12 = arith.addf %9, %11 : vector<8x32xf32>
    %cst_11 = arith.constant 0.000000e+00 : f32
    %13 = vector.broadcast %cst_11 : f32 to vector<8x32xf32>
    %14 = arith.maximumf %12, %13 : vector<8x32xf32>
    %c0_12 = arith.constant 0 : index
    %c0_13 = arith.constant 0 : index
    %15 = vector.load %arg6[%c0_12, %c0_13] : memref<8x32xf32, #tpu.memory_space<vmem>>, vector<8x32xf32>
    tpu.vector_store %arg6[%c0_12, %c0_13], %14 {strides = array<i32>} : memref<8x32xf32, #tpu.memory_space<vmem>>, vector<8x32xf32>,
    return
  }
  func.func @transform_0(%arg0: i32) -> (i32, i32) {
    %c0_i32 = arith.constant 0 : i32
    %c0_i32_0 = arith.constant 0 : i32
    return %arg0, %c0_i32 : i32, i32
  }
  func.func @transform_1(%arg0: i32) -> (i32, i32) {
    %c0_i32 = arith.constant 0 : i32
    %c0_i32_0 = arith.constant 0 : i32
    %c0_i32_1 = arith.constant 0 : i32
    return %c0_i32, %c0_i32_0 : i32, i32
  }
  func.func @transform_2(%arg0: i32) -> (i32, i32) {
    %c0_i32 = arith.constant 0 : i32
    %c0_i32_0 = arith.constant 0 : i32
    %c0_i32_1 = arith.constant 0 : i32
    return %c0_i32, %c0_i32_0 : i32, i32
  }
  func.func @transform_3(%arg0: i32) -> (i32, i32) {
    %c0_i32 = arith.constant 0 : i32
    %c0_i32_0 = arith.constant 0 : i32
    %c0_i32_1 = arith.constant 0 : i32
    return %c0_i32, %c0_i32_0 : i32, i32
  }
  func.func @transform_4(%arg0: i32) -> (i32, i32) {
    %c0_i32 = arith.constant 0 : i32
    %c0_i32_0 = arith.constant 0 : i32
    %c0_i32_1 = arith.constant 0 : i32
    return %c0_i32, %c0_i32_0 : i32, i32
  }
  func.func @transform_5(%arg0: i32) -> (i32, i32) {
    %c0_i32 = arith.constant 0 : i32
    %c0_i32_0 = arith.constant 0 : i32
    return %arg0, %c0_i32 : i32, i32
  }
}

</mosaic_0001>

<llo_original>
// kernel: preprocess.1
$region0: #{preprocess.1}
  #allocation0 [shape = 'u32[]', space=smem, size = 0x4, offset = 0x4, fixed_abs, tag = 'smem constant byte address 0x4 - core index']
  #allocation1 [shape = 'u32[144,128]{1,0:T(1,128)}', space=vmem, size = 0x12000, scoped, tag = 'internal scratch']
  %s0 = inlined_call_operand.hbm [shape: f32[8,32], index: 0, kind: input, shape index: {}]
  %s1 = inlined_call_operand.hbm [shape: f32[32,32], index: 1, kind: input, shape index: {}]
  %s2 = inlined_call_operand.vmem [shape: f32[1,32], index: 2, kind: input, shape index: {}]
  %s3 = inlined_call_operand.hbm [shape: f32[32,32], index: 3, kind: input, shape index: {}]
  %s4 = inlined_call_operand.vmem [shape: f32[1,32], index: 4, kind: input, shape index: {}]
  %s5 = inlined_call_operand.hbm [shape: f32[8,32], index: 5, kind: output, shape index: {}]
  %s6 = sld [smem:[#allocation0]]
  $region42: #{preprocess.1} parent=0
    _
  %s8 = ssub.s32 1, %s6
  %s9 = scalar_select 0, %s8, %s6
  $region1: #{preprocess.1} parent=0
    #allocation2 [shape = 'u8[4096]{0}', space=vmem, size = 0x1000, scoped, tag = 'input window, operand 0, single buffered']
    #allocation3 [shape = 's32[1]{0}', space=sflag, size = 0x4, scoped, tag = 'scoped memory for preprocess.1']
    #allocation4 [shape = 's32[1]{0}', space=sflag, size = 0x4, scoped, tag = 'scoped memory for preprocess.1']
    #allocation5 [shape = 'u8[16384]{0}', space=vmem, size = 0x4000, scoped, tag = 'input window, operand 1, single buffered']
    #allocation6 [shape = 's32[1]{0}', space=sflag, size = 0x4, scoped, tag = 'scoped memory for preprocess.1']
    #allocation7 [shape = 'u8[16384]{0}', space=vmem, size = 0x4000, scoped, tag = 'input window, operand 3, single buffered']
    #allocation8 [shape = 'u8[4096]{0}', space=vmem, size = 0x1000, scoped, tag = 'output window, operand 0, single buffered']
    %10 = vsyncpa [#allocation3], 0
    %11 = vsyncpa [#allocation6], 0
    %12 = vsyncpa [#allocation4], 0
    // Predicated region
    $region2: #{preprocess.1} parent=1 // pred_check
      _
    $region3: #{preprocess.1} parent=1 // pred_check_branch
      %14 = sbr.rel (0) target = $region5
    $region4: #{preprocess.1} parent=1 // pred_region
      %s16 = ssub.s32 128, 128
      %17 = vsyncadd [#allocation3], %s16
      %s19 = sshll.u32 [#allocation2], 4
      %s20 = int_to_ptr.vmem [resolvable:$true] %s19
      %22 = dma.hbm_to_vmem [thread:$0]  %s0, 128, %s20, [#allocation3]
    $region5: #{preprocess.1} parent=1 // pred_fallthru
      _
    // Predicated region
    $region6: #{preprocess.1} parent=1 // pred_check
      _
    $region7: #{preprocess.1} parent=1 // pred_check_branch
      %24 = sbr.rel (0) target = $region9
    $region8: #{preprocess.1} parent=1 // pred_region
      %s26 = ssub.s32 512, 512
      %27 = vsyncadd [#allocation6], %s26
      %s28 = sshll.u32 [#allocation5], 4
      %s29 = int_to_ptr.vmem [resolvable:$true] %s28
      %34 = dma.hbm_to_vmem [thread:$0]  %s1, 512, %s29, [#allocation6], 128, 128, 8
    $region9: #{preprocess.1} parent=1 // pred_fallthru
      _
    // Predicated region
    $region10: #{preprocess.1} parent=1 // pred_check
      _
    $region11: #{preprocess.1} parent=1 // pred_check_branch
      %36 = sbr.rel (0) target = $region13
    $region12: #{preprocess.1} parent=1 // pred_region
      _
    $region13: #{preprocess.1} parent=1 // pred_fallthru
      _
    // Predicated region
    $region14: #{preprocess.1} parent=1 // pred_check
      _
    $region15: #{preprocess.1} parent=1 // pred_check_branch
      %38 = sbr.rel (0) target = $region17
    $region16: #{preprocess.1} parent=1 // pred_region
      %s40 = ssub.s32 512, 512
      %41 = vsyncadd [#allocation6], %s40
      %s42 = sshll.u32 [#allocation7], 4
      %s43 = int_to_ptr.vmem [resolvable:$true] %s42
      %48 = dma.hbm_to_vmem [thread:$0]  %s3, 512, %s43, [#allocation6], 128, 128, 8
    $region17: #{preprocess.1} parent=1 // pred_fallthru
      _
    // Predicated region
    $region18: #{preprocess.1} parent=1 // pred_check
      _
    $region19: #{preprocess.1} parent=1 // pred_check_branch
      %50 = sbr.rel (0) target = $region21
    $region20: #{preprocess.1} parent=1 // pred_region
      _
    $region21: #{preprocess.1} parent=1 // pred_fallthru
      _
    // Predicated region
    $region22: #{preprocess.1} parent=1 // pred_check
      _
    $region23: #{preprocess.1} parent=1 // pred_check_branch
      %52 = sbr.rel (0) target = $region25
    $region24: #{preprocess.1} parent=1 // pred_region
      %53 = dma.done [#allocation3], 128
    $region25: #{preprocess.1} parent=1 // pred_fallthru
      _
    // Predicated region
    $region26: #{preprocess.1} parent=1 // pred_check
      _
    $region27: #{preprocess.1} parent=1 // pred_check_branch
      %55 = sbr.rel (0) target = $region29
    $region28: #{preprocess.1} parent=1 // pred_region
      %56 = dma.done [#allocation6], 512
    $region29: #{preprocess.1} parent=1 // pred_fallthru
      _
    // Predicated region
    $region30: #{preprocess.1} parent=1 // pred_check
      _
    $region31: #{preprocess.1} parent=1 // pred_check_branch
      %58 = sbr.rel (0) target = $region33
    $region32: #{preprocess.1} parent=1 // pred_region
      %59 = dma.done [#allocation6], 512
    $region33: #{preprocess.1} parent=1 // pred_fallthru
      _
    %v60 = vld [vmem:[#allocation2] sm:$0xff]
    %v61 = vld [vmem:[#allocation5] sm:$0xff]
    %v62 = vld [vmem:[#allocation5 + $0x8] sm:$0xff]
    %v63 = vld [vmem:[#allocation5 + $0x10] sm:$0xff]
    %v64 = vld [vmem:[#allocation5 + $0x18] sm:$0xff]
    %v65 = vld [vmem:[%s2] sm:$0x1]
    %v67 = vlaneseq
    %v68 = vshrl.u32 %v67, 7
    %v69 = vsub.s32 0, %v68
    %v70 = vrot.slane %v65, %v69
    %vm72 = vcmask 261120
    %v74 = vsel %vm72, %v60, 0
    %76 = vmatprep.subr.mxu0 0.0
    %77 = vmatpush1.msra.mxu0 %v61
    %78 = vmatprep.subr.mxu0 0.0
    %79 = vmatpush1.msra.mxu0 %v62
    %80 = vmatprep.subr.mxu0 0.0
    %81 = vmatpush1.msra.mxu0 %v63
    %82 = vmatprep.subr.mxu0 0.0
    %83 = vmatpush1.msra.mxu0 %v64
    %84 = vmatprep.subr.mxu0 0.0
    %85 = vmatpush1.msra.mxu0 0.0
    %86 = vmatprep.subr.mxu0 0.0
    %87 = vmatpush1.msra.mxu0 0.0
    %88 = vmatprep.subr.mxu0 0.0
    %89 = vmatpush1.msra.mxu0 0.0
    %90 = vmatprep.subr.mxu0 0.0
    %91 = vmatpush1.msra.mxu0 0.0
    %92 = vmatprep.subr.mxu0 0.0
    %93 = vmatpush1.msra.mxu0 0.0
    %94 = vmatprep.subr.mxu0 0.0
    %95 = vmatpush1.msra.mxu0 0.0
    %96 = vmatprep.subr.mxu0 0.0
    %97 = vmatpush1.msra.mxu0 0.0
    %98 = vmatprep.subr.mxu0 0.0
    %99 = vmatpush1.msra.mxu0 0.0
    %100 = vmatprep.subr.mxu0 0.0
    %101 = vmatpush1.msra.mxu0 0.0
    %102 = vmatprep.subr.mxu0 0.0
    %103 = vmatpush1.msra.mxu0 0.0
    %104 = vmatprep.subr.mxu0 0.0
    %105 = vmatpush1.msra.mxu0 0.0
    %106 = vmatprep.subr.mxu0 0.0
    %107 = vmatpush1.msra.mxu0 0.0
    %108 = vmatprep.subr.mxu0 0.0
    %109 = vmatpush1.msra.mxu0 0.0
    %110 = vmatprep.subr.mxu0 0.0
    %111 = vmatpush1.msra.mxu0 0.0
    %112 = vmatprep.subr.mxu0 0.0
    %113 = vmatpush1.msra.mxu0 0.0
    %114 = vmatprep.subr.mxu0 0.0
    %115 = vmatpush1.msra.mxu0 0.0
    %116 = vmatprep.subr.mxu0 0.0
    %117 = vmatpush1.msra.mxu0 0.0
    %118 = vmatprep.subr.mxu0 0.0
    %119 = vmatpush1.msra.mxu0 0.0
    %120 = vmatprep.subr.mxu0 0.0
    %121 = vmatpush1.msra.mxu0 0.0
    %122 = vmatprep.subr.mxu0 0.0
    %123 = vmatpush1.msra.mxu0 0.0
    %124 = vmatprep.subr.mxu0 0.0
    %125 = vmatpush1.msra.mxu0 0.0
    %126 = vmatprep.subr.mxu0 0.0
    %127 = vmatpush1.msra.mxu0 0.0
    %128 = vmatprep.subr.mxu0 0.0
    %129 = vmatpush1.msra.mxu0 0.0
    %130 = vmatprep.subr.mxu0 0.0
    %131 = vmatpush1.msra.mxu0 0.0
    %132 = vmatprep.subr.mxu0 0.0
    %133 = vmatpush1.msra.mxu0 0.0
    %134 = vmatprep.subr.mxu0 0.0
    %135 = vmatpush1.msra.mxu0 0.0
    %136 = vmatprep.subr.mxu0 0.0
    %137 = vmatpush1.msra.mxu0 0.0
    %138 = vmatprep.subr.mxu0 0.0
    %139 = vmatpush1.msra.mxu0 0.0
    %140 = vmatprep.mubr.f32.mxu0 0.0
    %141 = vmatmul.mubr.f32.gmra.mrb[0].mxu0 %v74
    %v142 = vpop.f32.mrb[0].mxu0
    %v143 = vadd.f32 %v70, %v142
    %v144 = vpop.f32.mrb[0].mxu0
    %145 = vdwg.mxu0
    %v146 = vmax.f32 %v143, 0.0
    %v147 = vld [vmem:[#allocation7] sm:$0xff]
    %v148 = vld [vmem:[#allocation7 + $0x8] sm:$0xff]
    %v149 = vld [vmem:[#allocation7 + $0x10] sm:$0xff]
    %v150 = vld [vmem:[#allocation7 + $0x18] sm:$0xff]
    %v151 = vld [vmem:[%s4] sm:$0x1]
    %v153 = vlaneseq
    %v154 = vshrl.u32 %v153, 7
    %v155 = vsub.s32 0, %v154
    %v156 = vrot.slane %v151, %v155
    %v159 = vsel %vm72, %v146, 0
    %161 = vmatprep.subr.mxu0 0.0
    %162 = vmatpush1.msra.mxu0 %v147
    %163 = vmatprep.subr.mxu0 0.0
    %164 = vmatpush1.msra.mxu0 %v148
    %165 = vmatprep.subr.mxu0 0.0
    %166 = vmatpush1.msra.mxu0 %v149
    %167 = vmatprep.subr.mxu0 0.0
    %168 = vmatpush1.msra.mxu0 %v150
    %169 = vmatprep.subr.mxu0 0.0
    %170 = vmatpush1.msra.mxu0 0.0
    %171 = vmatprep.subr.mxu0 0.0
    %172 = vmatpush1.msra.mxu0 0.0
    %173 = vmatprep.subr.mxu0 0.0
    %174 = vmatpush1.msra.mxu0 0.0
    %175 = vmatprep.subr.mxu0 0.0
    %176 = vmatpush1.msra.mxu0 0.0
    %177 = vmatprep.subr.mxu0 0.0
    %178 = vmatpush1.msra.mxu0 0.0
    %179 = vmatprep.subr.mxu0 0.0
    %180 = vmatpush1.msra.mxu0 0.0
    %181 = vmatprep.subr.mxu0 0.0
    %182 = vmatpush1.msra.mxu0 0.0
    %183 = vmatprep.subr.mxu0 0.0
    %184 = vmatpush1.msra.mxu0 0.0
    %185 = vmatprep.subr.mxu0 0.0
    %186 = vmatpush1.msra.mxu0 0.0
    %187 = vmatprep.subr.mxu0 0.0
    %188 = vmatpush1.msra.mxu0 0.0
    %189 = vmatprep.subr.mxu0 0.0
    %190 = vmatpush1.msra.mxu0 0.0
    %191 = vmatprep.subr.mxu0 0.0
    %192 = vmatpush1.msra.mxu0 0.0
    %193 = vmatprep.subr.mxu0 0.0
    %194 = vmatpush1.msra.mxu0 0.0
    %195 = vmatprep.subr.mxu0 0.0
    %196 = vmatpush1.msra.mxu0 0.0
    %197 = vmatprep.subr.mxu0 0.0
    %198 = vmatpush1.msra.mxu0 0.0
    %199 = vmatprep.subr.mxu0 0.0
    %200 = vmatpush1.msra.mxu0 0.0
    %201 = vmatprep.subr.mxu0 0.0
    %202 = vmatpush1.msra.mxu0 0.0
    %203 = vmatprep.subr.mxu0 0.0
    %204 = vmatpush1.msra.mxu0 0.0
    %205 = vmatprep.subr.mxu0 0.0
    %206 = vmatpush1.msra.mxu0 0.0
    %207 = vmatprep.subr.mxu0 0.0
    %208 = vmatpush1.msra.mxu0 0.0
    %209 = vmatprep.subr.mxu0 0.0
    %210 = vmatpush1.msra.mxu0 0.0
    %211 = vmatprep.subr.mxu0 0.0
    %212 = vmatpush1.msra.mxu0 0.0
    %213 = vmatprep.subr.mxu0 0.0
    %214 = vmatpush1.msra.mxu0 0.0
    %215 = vmatprep.subr.mxu0 0.0
    %216 = vmatpush1.msra.mxu0 0.0
    %217 = vmatprep.subr.mxu0 0.0
    %218 = vmatpush1.msra.mxu0 0.0
    %219 = vmatprep.subr.mxu0 0.0
    %220 = vmatpush1.msra.mxu0 0.0
    %221 = vmatprep.subr.mxu0 0.0
    %222 = vmatpush1.msra.mxu0 0.0
    %223 = vmatprep.subr.mxu0 0.0
    %224 = vmatpush1.msra.mxu0 0.0
    %225 = vmatprep.mubr.f32.mxu0 0.0
    %226 = vmatmul.mubr.f32.gmra.mrb[0].mxu0 %v159
    %v227 = vpop.f32.mrb[0].mxu0
    %v228 = vadd.f32 %v156, %v227
    %v229 = vpop.f32.mrb[0].mxu0
    %230 = vdwg.mxu0
    %v231 = vmax.f32 %v228, 0.0
    %232 = vst.msk [vmem:[#allocation8] sm:$0xff] %vm72, %v231
    // Predicated region
    $region34: #{preprocess.1} parent=1 // pred_check
      _
    $region35: #{preprocess.1} parent=1 // pred_check_branch
      %234 = sbr.rel (0) target = $region37
    $region36: #{preprocess.1} parent=1 // pred_region
      %s236 = ssub.s32 128, 128
      %237 = vsyncadd [#allocation4], %s236
      %s239 = sshll.u32 [#allocation8], 4
      %s240 = int_to_ptr.vmem [resolvable:$true] %s239
      %242 = dma.vmem_to_hbm [thread:$0]  %s240, 128, %s5, [#allocation4]
    $region37: #{preprocess.1} parent=1 // pred_fallthru
      _
    // Predicated region
    $region38: #{preprocess.1} parent=1 // pred_check
      _
    $region39: #{preprocess.1} parent=1 // pred_check_branch
      %244 = sbr.rel (0) target = $region41
    $region40: #{preprocess.1} parent=1 // pred_region
      %245 = dma.done [#allocation4], 128
    $region41: #{preprocess.1} parent=1 // pred_fallthru
      _
    %246 = vsyncpa [#allocation3], 1
    %247 = vsyncpa [#allocation6], 1
    %248 = vsyncpa [#allocation4], 1

</llo_original>
